<compile_context>
chip_gen: v5e
topology: v5e:2x2
jax: 0.10.0
libtpu: 0.0.40
codegen_flags: <defaults>
</compile_context>

<pallas_src>
import jax
import jax.numpy as jnp
from jax.experimental import pallas as pl
from jax.experimental.pallas import tpu as pltpu


# ----------------------------- Pallas kernel ------------------------------

def _moe_kernel(x_ref, w_ref, w1_ref, w3_ref, w2_ref, o_ref, acc_ref):
    """Grid = (token_tiles, n_experts, f_tiles).  The expert and F axes are
    reduction axes: the f32 accumulator is resident across them and collects
    weighted expert outputs (weight == 0 for experts the token was not
    routed to)."""
    e = pl.program_id(1)
    f = pl.program_id(2)
    last_e = pl.num_programs(1) - 1
    last_f = pl.num_programs(2) - 1

    @pl.when((e == 0) & (f == 0))
    def _():
        acc_ref[...] = jnp.zeros_like(acc_ref)

    x = x_ref[...]                                                    # (tm, D)

    # GLU MLP slice for expert e, F-tile f:  w2_f( silu(x @ w1_f) * (x @ w3_f) )
    h1 = jnp.dot(x, w1_ref[0], preferred_element_type=jnp.float32)    # (tm, tf)
    h3 = jnp.dot(x, w3_ref[0], preferred_element_type=jnp.float32)    # (tm, tf)
    h = (h1 * jax.nn.sigmoid(h1)) * h3                                # silu(h1)*h3
    y = jnp.dot(h.astype(x.dtype), w2_ref[0],
                preferred_element_type=jnp.float32)                   # (tm, D)

    # Per-token routing weight for this expert — selected DMA-side by the
    # BlockSpec (no in-kernel lane select).
    wt = w_ref[0].astype(jnp.float32)                                 # (tm, 1)
    acc_ref[...] += wt * y

    @pl.when((e == last_e) & (f == last_f))
    def _():
        o_ref[...] = acc_ref[...].astype(o_ref.dtype)


def _round_up(x, m):
    return ((x + m - 1) // m) * m


def _pick_f_tile(F, pref):
    """Full F if small, else the largest 128-multiple divisor of F <= pref."""
    if F <= pref:
        return F
    for cand in range(pref - pref % 128, 0, -128):
        if F % cand == 0:
            return cand
    return F


def moe_expert_compute(x2d, dense_weights, w1, w3, w2, *, tm=256, tf=1024):
    """x2d: (T, D); dense_weights: (T, E); w1/w3: (E, D, F); w2: (E, F, D)."""
    T, D = x2d.shape
    E, _, F = w1.shape
    dtype = x2d.dtype

    # Token tile: as large as requested, but never larger than the 8-aligned
    # padded token count (keeps the toy problem from padding 16 -> 256).
    tm = min(tm, _round_up(T, 8))
    T_pad = _round_up(T, tm)
    if T_pad != T:
        x2d = jnp.pad(x2d, ((0, T_pad - T), (0, 0)))
        dense_weights = jnp.pad(dense_weights, ((0, T_pad - T), (0, 0)))

    # Intermediate-dim tile.
    tf = _pick_f_tile(F, tf)

    # Routing weights as (E, T, 1): the kernel reads a (tm, 1) per-expert
    # column purely via the BlockSpec index_map.
    w_e_t = jnp.transpose(dense_weights, (1, 0)).reshape(E, T_pad, 1)

    grid = (T_pad // tm, E, F // tf)

    # VMEM budget: double-buffered weight tiles + x/out/routing tiles + acc.
    itemsize = jnp.dtype(dtype).itemsize
    est = (2 * 3 * D * tf * itemsize            # w1/w3/w2 tiles, double-buffered
           + 2 * (2 * tm * D + tm) * itemsize   # x, out, routing tiles
           + tm * D * 4)                        # f32 accumulator scratch
    vmem_limit = max(min(2 * est + (8 << 20), 60 << 20), 32 << 20)

    out = pl.pallas_call(
        _moe_kernel,
        out_shape=jax.ShapeDtypeStruct((T_pad, D), dtype),
        grid_spec=pltpu.PrefetchScalarGridSpec(
            num_scalar_prefetch=0,
            grid=grid,
            in_specs=[
                pl.BlockSpec((tm, D), lambda i, e, f: (i, 0)),        # x tile
                pl.BlockSpec((1, tm, 1), lambda i, e, f: (e, i, 0)),  # routing wt
                pl.BlockSpec((1, D, tf), lambda i, e, f: (e, 0, f)),  # w1[e] F-tile
                pl.BlockSpec((1, D, tf), lambda i, e, f: (e, 0, f)),  # w3[e] F-tile
                pl.BlockSpec((1, tf, D), lambda i, e, f: (e, f, 0)),  # w2[e] F-tile
            ],
            out_specs=pl.BlockSpec((tm, D), lambda i, e, f: (i, 0)),
            scratch_shapes=[pltpu.VMEM((tm, D), jnp.float32)],
        ),
        compiler_params=pltpu.CompilerParams(
            dimension_semantics=("parallel", "arbitrary", "arbitrary"),
            vmem_limit_bytes=vmem_limit),
    )(x2d, w_e_t, w1, w3, w2)

    return out[:T]


# ------------------------------ Full block --------------------------------

def sparse_moe_block(hidden_states, params, *, top_k):
    """Reproduces SparseMoeBlock.forward for n_experts > 1 (gated_mlp=True,
    hidden_act='silu'). Returns (final_hidden_states, softmax(router_logits))."""
    gate_w = params["gate"]          # (D, E)
    w1, w3, w2 = params["w1"], params["w3"], params["w2"]

    bsz, seqlen, dim = hidden_states.shape
    n_experts = gate_w.shape[1]
    x2d = hidden_states.reshape(-1, dim)                     # (T, D)

    # --- router (glue, plain JAX; torch.topk has no clean Pallas analogue) ---
    router_logits = x2d @ gate_w                             # (T, E)
    routing_probs = jax.nn.softmax(router_logits.astype(jnp.float32), axis=-1)
    top_w, top_idx = jax.lax.top_k(routing_probs, top_k)     # (T, K)
    top_w = top_w / jnp.sum(top_w, axis=-1, keepdims=True)
    top_w = top_w.astype(hidden_states.dtype)

    # Dense (T, E) weight matrix: routing weight where selected, 0 otherwise.
    dense_w = jnp.sum(
        jax.nn.one_hot(top_idx, n_experts, dtype=hidden_states.dtype)
        * top_w[..., None],
        axis=1)                                              # (T, E)

    # --- expert hot path (Pallas kernel) ---
    final2d = moe_expert_compute(x2d, dense_w, w1, w3, w2)
    final = final2d.reshape(bsz, seqlen, dim).astype(hidden_states.dtype)

    # Same as torch: softmax in the logits dtype.
    router_probs_out = jax.nn.softmax(router_logits, axis=-1)
    return final, router_probs_out


# ------------------------------ reference ---------------------------------

def reference(hidden_states, params, *, top_k):
    gate_w = params["gate"]
    w1, w3, w2 = params["w1"], params["w3"], params["w2"]
    bsz, seqlen, dim = hidden_states.shape
    n_experts = gate_w.shape[1]
    x2d = hidden_states.reshape(-1, dim)

    router_logits = x2d @ gate_w
    routing_probs = jax.nn.softmax(router_logits.astype(jnp.float32), axis=-1)
    top_w, top_idx = jax.lax.top_k(routing_probs, top_k)
    top_w = top_w / jnp.sum(top_w, axis=-1, keepdims=True)
    top_w = top_w.astype(hidden_states.dtype)
    dense_w = jnp.sum(
        jax.nn.one_hot(top_idx, n_experts, dtype=hidden_states.dtype)
        * top_w[..., None], axis=1)

    out = jnp.zeros_like(x2d)
    for e in range(n_experts):
        h = jax.nn.silu(x2d @ w1[e]) * (x2d @ w3[e])
        y = h @ w2[e]
        out = out + dense_w[:, e:e + 1] * y
    return out.reshape(bsz, seqlen, dim), jax.nn.softmax(router_logits, axis=-1)


# --------------------------------- main ------------------------------------

if __name__ == "__main__":
    # Synthetic "config": hidden_size=32, intermediate_size=64, num_experts=4,
    # num_experts_per_tok=2, gated_mlp=True, hidden_act='silu'.
    D, F, E, TOP_K = 32, 64, 4, 2
    BSZ, SEQ = 2, 8

    key = jax.random.PRNGKey(0)
    k_x, k_g, k_w1, k_w3, k_w2 = jax.random.split(key, 5)

    params = {
        "gate": (jax.random.normal(k_g, (D, E), jnp.float32) * 0.05),
        "w1": (jax.random.normal(k_w1, (E, D, F), jnp.float32) * 0.05),
        "w3": (jax.random.normal(k_w3, (E, D, F), jnp.float32) * 0.05),
        "w2": (jax.random.normal(k_w2, (E, F, D), jnp.float32) * 0.05),
    }
    x = jax.random.normal(k_x, (BSZ, SEQ, D), jnp.float32)

    out, router_probs = jax.block_until_ready(
        sparse_moe_block(x, params, top_k=TOP_K))

    ref_out, ref_probs = reference(x, params, top_k=TOP_K)
    assert out.shape == (BSZ, SEQ, D) and router_probs.shape == (BSZ * SEQ, E)
    assert jnp.allclose(out, ref_out, atol=1e-5, rtol=1e-5)
    assert jnp.allclose(router_probs, ref_probs, atol=1e-6, rtol=1e-6)

    # TODO(synk): n_experts == 1 branch (no gate) not exercised here.
    print("KERNEL_OK")
</pallas_src>

<mosaic_0001>
module attributes {stable_mosaic.version = 11 : i64} {
  func.func @_moe_kernel(%arg0: i32, %arg1: i32, %arg2: i32, %arg3: memref<16x32xf32, #tpu.memory_space<vmem>>, %arg4: memref<1x16x1xf32, #tpu.memory_space<vmem>>, %arg5: memref<1x32x64xf32, #tpu.memory_space<vmem>>, %arg6: memref<1x32x64xf32, #tpu.memory_space<vmem>>, %arg7: memref<1x64x32xf32, #tpu.memory_space<vmem>>, %arg8: memref<16x32xf32, #tpu.memory_space<vmem>>, %arg9: memref<16x32xf32, #tpu.memory_space<vmem>>) attributes {dimension_semantics = [#tpu.dimension_semantics<parallel>, #tpu.dimension_semantics<arbitrary>, #tpu.dimension_semantics<arbitrary>], iteration_bounds = array<i64: 1, 4, 1>, scalar_prefetch = 0 : i64, scratch_operands = 1 : i64, tpu.core_type = #tpu.core_type<tc>, window_params = [{transform_indices = @transform_0, window_bounds = array<i64: 16, 32>}, {transform_indices = @transform_1, window_bounds = array<i64: 1, 16, 1>}, {transform_indices = @transform_2, window_bounds = array<i64: 1, 32, 64>}, {transform_indices = @transform_3, window_bounds = array<i64: 1, 32, 64>}, {transform_indices = @transform_4, window_bounds = array<i64: 1, 64, 32>}, {transform_indices = @transform_5, window_bounds = array<i64: 16, 32>}]} {
    %c0_i32 = arith.constant 0 : i32
    %0 = arith.cmpi eq, %arg1, %c0_i32 : i32
    %c0_i32_0 = arith.constant 0 : i32
    %1 = arith.cmpi eq, %arg2, %c0_i32_0 : i32
    %2 = arith.andi %0, %1 : i1
    %3 = arith.extui %2 : i1 to i32
    %c0_i32_1 = arith.constant 0 : i32
    %4 = arith.cmpi ne, %3, %c0_i32_1 : i32
    scf.if %4 {
      %cst_24 = arith.constant 0.000000e+00 : f32
      %34 = vector.broadcast %cst_24 : f32 to vector<16x32xf32>
      %c0_25 = arith.constant 0 : index
      %c0_26 = arith.constant 0 : index
      %35 = vector.load %arg9[%c0_25, %c0_26] : memref<16x32xf32, #tpu.memory_space<vmem>>, vector<16x32xf32>
      tpu.vector_store %arg9[%c0_25, %c0_26], %34 {strides = array<i32>} : memref<16x32xf32, #tpu.memory_space<vmem>>, vector<16x32xf32>,
    } else {
    }
    %c0 = arith.constant 0 : index
    %c0_2 = arith.constant 0 : index
    %5 = vector.load %arg3[%c0, %c0_2] : memref<16x32xf32, #tpu.memory_space<vmem>>, vector<16x32xf32>
    %c0_3 = arith.constant 0 : index
    %c0_4 = arith.constant 0 : index
    %c0_5 = arith.constant 0 : index
    %6 = vector.load %arg5[%c0_3, %c0_4, %c0_5] : memref<1x32x64xf32, #tpu.memory_space<vmem>>, vector<1x32x64xf32>
    %7 = vector.shape_cast %6 : vector<1x32x64xf32> to vector<32x64xf32>
    %cst = arith.constant dense<0.000000e+00> : vector<16x64xf32>
    %8 = tpu.matmul %5, %7, %cst {dimension_numbers = #tpu.dot_dimension_numbers<[1], [0], [0], [1], [0, 0, 1, 1], [], []>} : vector<16x32xf32>, vector<32x64xf32>, vector<16x64xf32> -> vector<16x64xf32>
    %c0_6 = arith.constant 0 : index
    %c0_7 = arith.constant 0 : index
    %c0_8 = arith.constant 0 : index
    %9 = vector.load %arg6[%c0_6, %c0_7, %c0_8] : memref<1x32x64xf32, #tpu.memory_space<vmem>>, vector<1x32x64xf32>
    %10 = vector.shape_cast %9 : vector<1x32x64xf32> to vector<32x64xf32>
    %cst_9 = arith.constant dense<0.000000e+00> : vector<16x64xf32>
    %11 = tpu.matmul %5, %10, %cst_9 {dimension_numbers = #tpu.dot_dimension_numbers<[1], [0], [0], [1], [0, 0, 1, 1], [], []>} : vector<16x32xf32>, vector<32x64xf32>, vector<16x64xf32> -> vector<16x64xf32>
    %12 = arith.negf %8 : vector<16x64xf32>
    %13 = math.exp %12 : vector<16x64xf32>
    %cst_10 = arith.constant 1.000000e+00 : f32
    %14 = vector.broadcast %cst_10 : f32 to vector<16x64xf32>
    %15 = arith.addf %14, %13 : vector<16x64xf32>
    %16 = arith.divf %14, %15 : vector<16x64xf32>
    %17 = arith.mulf %8, %16 : vector<16x64xf32>
    %18 = arith.mulf %17, %11 : vector<16x64xf32>
    %c0_11 = arith.constant 0 : index
    %c0_12 = arith.constant 0 : index
    %c0_13 = arith.constant 0 : index
    %19 = vector.load %arg7[%c0_11, %c0_12, %c0_13] : memref<1x64x32xf32, #tpu.memory_space<vmem>>, vector<1x64x32xf32>
    %20 = vector.shape_cast %19 : vector<1x64x32xf32> to vector<64x32xf32>
    %cst_14 = arith.constant dense<0.000000e+00> : vector<16x32xf32>
    %21 = tpu.matmul %18, %20, %cst_14 {dimension_numbers = #tpu.dot_dimension_numbers<[1], [0], [0], [1], [0, 0, 1, 1], [], []>} : vector<16x64xf32>, vector<64x32xf32>, vector<16x32xf32> -> vector<16x32xf32>
    %c0_15 = arith.constant 0 : index
    %c0_16 = arith.constant 0 : index
    %c0_17 = arith.constant 0 : index
    %22 = vector.load %arg4[%c0_15, %c0_16, %c0_17] : memref<1x16x1xf32, #tpu.memory_space<vmem>>, vector<1x16x1xf32>
    %23 = vector.shape_cast %22 : vector<1x16x1xf32> to vector<16x1xf32>
    %c0_18 = arith.constant 0 : index
    %c0_19 = arith.constant 0 : index
    %24 = vector.load %arg9[%c0_18, %c0_19] : memref<16x32xf32, #tpu.memory_space<vmem>>, vector<16x32xf32>
    %25 = vector.broadcast %23 : vector<16x1xf32> to vector<16x32xf32>
    %26 = arith.mulf %25, %21 : vector<16x32xf32>
    %27 = arith.addf %24, %26 : vector<16x32xf32>
    %c0_20 = arith.constant 0 : index
    %c0_21 = arith.constant 0 : index
    %28 = vector.load %arg9[%c0_20, %c0_21] : memref<16x32xf32, #tpu.memory_space<vmem>>, vector<16x32xf32>
    tpu.vector_store %arg9[%c0_20, %c0_21], %27 {strides = array<i32>} : memref<16x32xf32, #tpu.memory_space<vmem>>, vector<16x32xf32>,
    %c3_i32 = arith.constant 3 : i32
    %29 = arith.cmpi eq, %arg1, %c3_i32 : i32
    %c0_i32_22 = arith.constant 0 : i32
    %30 = arith.cmpi eq, %arg2, %c0_i32_22 : i32
    %31 = arith.andi %29, %30 : i1
    %32 = arith.extui %31 : i1 to i32
    %c0_i32_23 = arith.constant 0 : i32
    %33 = arith.cmpi ne, %32, %c0_i32_23 : i32
    scf.if %33 {
      %c0_24 = arith.constant 0 : index
      %c0_25 = arith.constant 0 : index
      %34 = vector.load %arg9[%c0_24, %c0_25] : memref<16x32xf32, #tpu.memory_space<vmem>>, vector<16x32xf32>
      %c0_26 = arith.constant 0 : index
      %c0_27 = arith.constant 0 : index
      %35 = vector.load %arg8[%c0_26, %c0_27] : memref<16x32xf32, #tpu.memory_space<vmem>>, vector<16x32xf32>
      tpu.vector_store %arg8[%c0_26, %c0_27], %34 {strides = array<i32>} : memref<16x32xf32, #tpu.memory_space<vmem>>, vector<16x32xf32>,
    } else {
    }
    return
  }
  func.func @transform_0(%arg0: i32, %arg1: i32, %arg2: i32) -> (i32, i32) {
    %c0_i32 = arith.constant 0 : i32
    %c0_i32_0 = arith.constant 0 : i32
    return %arg0, %c0_i32 : i32, i32
  }
  func.func @transform_1(%arg0: i32, %arg1: i32, %arg2: i32) -> (i32, i32, i32) {
    %c0_i32 = arith.constant 0 : i32
    %c0_i32_0 = arith.constant 0 : i32
    return %arg1, %arg0, %c0_i32 : i32, i32, i32
  }
  func.func @transform_2(%arg0: i32, %arg1: i32, %arg2: i32) -> (i32, i32, i32) {
    %c0_i32 = arith.constant 0 : i32
    %c0_i32_0 = arith.constant 0 : i32
    return %arg1, %c0_i32, %arg2 : i32, i32, i32
  }
  func.func @transform_3(%arg0: i32, %arg1: i32, %arg2: i32) -> (i32, i32, i32) {
    %c0_i32 = arith.constant 0 : i32
    %c0_i32_0 = arith.constant 0 : i32
    return %arg1, %c0_i32, %arg2 : i32, i32, i32
  }
  func.func @transform_4(%arg0: i32, %arg1: i32, %arg2: i32) -> (i32, i32, i32) {
    %c0_i32 = arith.constant 0 : i32
    %c0_i32_0 = arith.constant 0 : i32
    return %arg1, %arg2, %c0_i32 : i32, i32, i32
  }
  func.func @transform_5(%arg0: i32, %arg1: i32, %arg2: i32) -> (i32, i32) {
    %c0_i32 = arith.constant 0 : i32
    %c0_i32_0 = arith.constant 0 : i32
    return %arg0, %c0_i32 : i32, i32
  }
}

</mosaic_0001>

<llo_original>
// kernel: tpu_custom_call.1
$region0: #{tpu_custom_call.1}
  #allocation0 [shape = 'u32[]', space=smem, size = 0x4, offset = 0x4, fixed_abs, tag = 'smem constant byte address 0x4 - core index']
  #allocation1 [shape = 'u32[72,128]{1,0:T(1,128)}', space=vmem, size = 0x9000, scoped, tag = 'internal scratch']
  #allocation2 [shape = 'f32[16,32]{1,0:T(8,128)}', space=vmem, size = 0x2000, scoped, tag = 'scratch operand']
  %s0 = inlined_call_operand.vmem [shape: f32[16,32], index: 0, kind: input, shape index: {}]
  %s1 = inlined_call_operand.vmem [shape: f32[4,16,1], index: 1, kind: input, shape index: {}]
  %s2 = inlined_call_operand.vmem [shape: f32[4,32,64], index: 2, kind: input, shape index: {}]
  %s3 = inlined_call_operand.vmem [shape: f32[4,32,64], index: 3, kind: input, shape index: {}]
  %s4 = inlined_call_operand.vmem [shape: f32[4,64,32], index: 4, kind: input, shape index: {}]
  %s5 = inlined_call_operand.hbm [shape: f32[16,32], index: 5, kind: output, shape index: {}]
  %s6 = sld [smem:[#allocation0]]
  $region61: #{tpu_custom_call.1} parent=0
    _
  %s8 = ssub.s32 1, %s6
  %s9 = scalar_select 0, %s8, %s6
  $region1: #{tpu_custom_call.1} parent=0
    #allocation3 [shape = 'u8[8192]{0}', space=vmem, size = 0x2000, scoped, tag = 'output window, operand 0, single buffered']
    #allocation4 [shape = 's32[2]{0}', space=sflag, size = 0x8, scoped, tag = 'scoped memory for tpu_custom_call.1']
    %10 = vsyncpa [#allocation4], 0
    loop: start=0, step=1, limit=6
    $region2: #{tpu_custom_call.1} parent=1 // loop_pre_header
      _
    $region3: #{tpu_custom_call.1} parent=1 // loop_header
      %s12 = sphi 0, %s16
      %p13 = scmp.ge.s32.totalorder %s12, 6
      %s19 = sphi 0, %s38
      %s20 = sphi 0, %s34
      %s21 = sphi 0, %s30
      %s22 = sphi 0, %s19
      %s23 = sphi 0, %s20
      %s24 = sphi 0, %s21
      %s25 = sphi 0, %s22
      %s26 = sphi 0, %s23
      %s27 = sphi 0, %s24
      %s41 = sphi 0, %s43
      %s44 = sphi 0, %s41
      %s45 = sphi 0, %s44
      %s61 = sphi 0, %s45
      %s69 = sphi 0, %s71
      %s72 = sphi 0, %s69
      %s73 = sphi 0, %s72
      %s89 = sphi 0, %s73
      %s97 = sphi 0, %s99
      %s100 = sphi 0, %s97
      %s101 = sphi 0, %s100
      %s117 = sphi 0, %s101
      %s125 = sphi 0, %s127
      %s128 = sphi 0, %s125
      %s129 = sphi 0, %s128
      %s145 = sphi 0, %s129
      %s153 = sphi 0, %s155
      %s156 = sphi 0, %s153
      %s157 = sphi 0, %s156
      %s173 = sphi 0, %s157
      %s179 = sphi 0, %s181
      %s182 = sphi 0, %s179
      %s183 = sphi 0, %s182
      %s199 = sphi 0, %s183
    $region4: #{tpu_custom_call.1} parent=1 // loop_header_branch
      %15 = sbr.rel (%p13) target = $region8
    $region5: #{tpu_custom_call.1} parent=1 // loop_body
      %s17 = ssub.s32 %s12, 1
      %s18 = ssub.s32 %s12, 2
      %s28 = sadd.s32 1, %s21
      %p29 = scmp.ge.s32.totalorder %s28, 1
      %s30 = scalar_select %p29, 0, %s28
      %s31 = sadd.s32 1, %s20
      %s32 = scalar_select %p29, %s31, %s20
      %p33 = scmp.ge.s32.totalorder %s32, 4
      %s34 = scalar_select %p33, 0, %s32
      %s35 = sadd.s32 1, %s19
      %s36 = scalar_select %p33, %s35, %s19
      %p37 = scmp.ge.s32.totalorder %s36, 1
      %s38 = scalar_select %p37, 0, %s36
      %s39 = ssub.s32 %s19, %s38
      %p40 = scmp.eq.s32.totalorder %s39, 0
      %s42 = sadd.s32 %s41, 1
      %s43 = scalar_select %p40, %s41, %s42
      %p46 = pneg %p40
      %p47 = scmp.eq.s32.totalorder %s12, 3
      %p48 = por %p46, %p47
      %p49 = scmp.ne.s32.totalorder %s41, %s44
      %p50 = scmp.eq.s32.totalorder %s12, 0
      %p51 = por %p49, %p50
      %p52 = scmp.ne.s32.totalorder %s41, %s44
      %p53 = scmp.eq.s32.totalorder %s17, 3
      %p54 = por %p52, %p53
      %p55 = scmp.ne.s32.totalorder %s44, %s45
      %p56 = scmp.eq.s32.totalorder %s17, 0
      %p57 = por %p55, %p56
      %p58 = scmp.ne.s32.totalorder %s44, %s45
      %p59 = scmp.eq.s32.totalorder %s18, 3
      %p60 = por %p58, %p59
      %p62 = scmp.ne.s32.totalorder %s45, %s61
      %p63 = scmp.eq.s32.totalorder %s18, 0
      %p64 = por %p62, %p63
      %s65 = ssub.s32 %s20, %s34
      %s66 = ssub.s32 %s19, %s38
      %s67 = sor.u32 %s65, %s66
      %p68 = scmp.eq.s32.totalorder %s67, 0
      %s70 = sadd.s32 %s69, 1
      %s71 = scalar_select %p68, %s69, %s70
      %p74 = pneg %p68
      %p75 = scmp.eq.s32.totalorder %s12, 3
      %p76 = por %p74, %p75
      %p77 = scmp.ne.s32.totalorder %s69, %s72
      %p78 = scmp.eq.s32.totalorder %s12, 0
      %p79 = por %p77, %p78
      %p80 = scmp.ne.s32.totalorder %s69, %s72
      %p81 = scmp.eq.s32.totalorder %s17, 3
      %p82 = por %p80, %p81
      %p83 = scmp.ne.s32.totalorder %s72, %s73
      %p84 = scmp.eq.s32.totalorder %s17, 0
      %p85 = por %p83, %p84
      %p86 = scmp.ne.s32.totalorder %s72, %s73
      %p87 = scmp.eq.s32.totalorder %s18, 3
      %p88 = por %p86, %p87
      %p90 = scmp.ne.s32.totalorder %s73, %s89
      %p91 = scmp.eq.s32.totalorder %s18, 0
      %p92 = por %p90, %p91
      %s93 = ssub.s32 %s20, %s34
      %s94 = ssub.s32 %s21, %s30
      %s95 = sor.u32 %s93, %s94
      %p96 = scmp.eq.s32.totalorder %s95, 0
      %s98 = sadd.s32 %s97, 1
      %s99 = scalar_select %p96, %s97, %s98
      %p102 = pneg %p96
      %p103 = scmp.eq.s32.totalorder %s12, 3
      %p104 = por %p102, %p103
      %p105 = scmp.ne.s32.totalorder %s97, %s100
      %p106 = scmp.eq.s32.totalorder %s12, 0
      %p107 = por %p105, %p106
      %p108 = scmp.ne.s32.totalorder %s97, %s100
      %p109 = scmp.eq.s32.totalorder %s17, 3
      %p110 = por %p108, %p109
      %p111 = scmp.ne.s32.totalorder %s100, %s101
      %p112 = scmp.eq.s32.totalorder %s17, 0
      %p113 = por %p111, %p112
      %p114 = scmp.ne.s32.totalorder %s100, %s101
      %p115 = scmp.eq.s32.totalorder %s18, 3
      %p116 = por %p114, %p115
      %p118 = scmp.ne.s32.totalorder %s101, %s117
      %p119 = scmp.eq.s32.totalorder %s18, 0
      %p120 = por %p118, %p119
      %s121 = ssub.s32 %s20, %s34
      %s122 = ssub.s32 %s21, %s30
      %s123 = sor.u32 %s121, %s122
      %p124 = scmp.eq.s32.totalorder %s123, 0
      %s126 = sadd.s32 %s125, 1
      %s127 = scalar_select %p124, %s125, %s126
      %p130 = pneg %p124
      %p131 = scmp.eq.s32.totalorder %s12, 3
      %p132 = por %p130, %p131
      %p133 = scmp.ne.s32.totalorder %s125, %s128
      %p134 = scmp.eq.s32.totalorder %s12, 0
      %p135 = por %p133, %p134
      %p136 = scmp.ne.s32.totalorder %s125, %s128
      %p137 = scmp.eq.s32.totalorder %s17, 3
      %p138 = por %p136, %p137
      %p139 = scmp.ne.s32.totalorder %s128, %s129
      %p140 = scmp.eq.s32.totalorder %s17, 0
      %p141 = por %p139, %p140
      %p142 = scmp.ne.s32.totalorder %s128, %s129
      %p143 = scmp.eq.s32.totalorder %s18, 3
      %p144 = por %p142, %p143
      %p146 = scmp.ne.s32.totalorder %s129, %s145
      %p147 = scmp.eq.s32.totalorder %s18, 0
      %p148 = por %p146, %p147
      %s149 = ssub.s32 %s20, %s34
      %s150 = ssub.s32 %s21, %s30
      %s151 = sor.u32 %s149, %s150
      %p152 = scmp.eq.s32.totalorder %s151, 0
      %s154 = sadd.s32 %s153, 1
      %s155 = scalar_select %p152, %s153, %s154
      %p158 = pneg %p152
      %p159 = scmp.eq.s32.totalorder %s12, 3
      %p160 = por %p158, %p159
      %p161 = scmp.ne.s32.totalorder %s153, %s156
      %p162 = scmp.eq.s32.totalorder %s12, 0
      %p163 = por %p161, %p162
      %p164 = scmp.ne.s32.totalorder %s153, %s156
      %p165 = scmp.eq.s32.totalorder %s17, 3
      %p166 = por %p164, %p165
      %p167 = scmp.ne.s32.totalorder %s156, %s157
      %p168 = scmp.eq.s32.totalorder %s17, 0
      %p169 = por %p167, %p168
      %p170 = scmp.ne.s32.totalorder %s156, %s157
      %p171 = scmp.eq.s32.totalorder %s18, 3
      %p172 = por %p170, %p171
      %p174 = scmp.ne.s32.totalorder %s157, %s173
      %p175 = scmp.eq.s32.totalorder %s18, 0
      %p176 = por %p174, %p175
      %s177 = ssub.s32 %s19, %s38
      %p178 = scmp.eq.s32.totalorder %s177, 0
      %s180 = sadd.s32 %s179, 1
      %s181 = scalar_select %p178, %s179, %s180
      %p184 = pneg %p178
      %p185 = scmp.eq.s32.totalorder %s12, 3
      %p186 = por %p184, %p185
      %p187 = scmp.ne.s32.totalorder %s179, %s182
      %p188 = scmp.eq.s32.totalorder %s12, 0
      %p189 = por %p187, %p188
      %p190 = scmp.ne.s32.totalorder %s179, %s182
      %p191 = scmp.eq.s32.totalorder %s17, 3
      %p192 = por %p190, %p191
      %p193 = scmp.ne.s32.totalorder %s182, %s183
      %p194 = scmp.eq.s32.totalorder %s17, 0
      %p195 = por %p193, %p194
      %p196 = scmp.ne.s32.totalorder %s182, %s183
      %p197 = scmp.eq.s32.totalorder %s18, 3
      %p198 = por %p196, %p197
      %p200 = scmp.ne.s32.totalorder %s183, %s199
      %p201 = scmp.eq.s32.totalorder %s18, 0
      %p202 = por %p200, %p201
      %p203 = scmp.le.s32.totalorder 1, %s12
      %p204 = scmp.lt.s32.totalorder %s12, 5
      %p205 = pnand %p203, %p204
      %p206 = pneg %p205
      // Predicated region
      $region9: #{tpu_custom_call.1} parent=5 // pred_check
        _
      $region10: #{tpu_custom_call.1} parent=5 // pred_check_branch
        %208 = sbr.rel (%p205) target = $region12
      $region11: #{tpu_custom_call.1} parent=5 // pred_region
        %s209 = ssub.s32 %s12, 1
        // Predicated region
        $region13: #{tpu_custom_call.1} parent=11 // pred_check
          %p210 = pneg %p57
        $region14: #{tpu_custom_call.1} parent=11 // pred_check_branch
          %212 = sbr.rel (%p210) target = $region16
        $region15: #{tpu_custom_call.1} parent=11 // pred_region
          %s213 = smul.u32 2, %s22
          %p214 = scmp.lt.s32.totalorder %s213, 1
          %s215 = scalar_select %p214, %s213, 1
          %s216 = smul.addr %s215, 8
          %s217 = scalar_lea.vmem %s0, %s216
          %s218 = smul.u32 2, %s22
        $region16: #{tpu_custom_call.1} parent=11 // pred_fallthru
          _
      $region12: #{tpu_custom_call.1} parent=5 // pred_fallthru
        _
      %p219 = scmp.lt.s32.totalorder %s12, 4
      // Predicated region
      $region17: #{tpu_custom_call.1} parent=5 // pred_check
        %p220 = pneg %p219
      $region18: #{tpu_custom_call.1} parent=5 // pred_check_branch
        %222 = sbr.rel (%p220) target = $region20
      $region19: #{tpu_custom_call.1} parent=5 // pred_region
        // Predicated region
        $region21: #{tpu_custom_call.1} parent=19 // pred_check
          %p223 = pneg %p79
        $region22: #{tpu_custom_call.1} parent=19 // pred_check_branch
          %225 = sbr.rel (%p223) target = $region24
        $region23: #{tpu_custom_call.1} parent=19 // pred_region
          %s226 = smul.u32 2, %s19
          %p227 = scmp.lt.s32.totalorder %s20, 3
          %s228 = scalar_select %p227, %s20, 3
          %p229 = scmp.lt.s32.totalorder %s226, 1
          %s230 = scalar_select %p229, %s226, 1
          %s231 = smul.addr %s228, 2
          %s232 = sadd.s32 %s230, %s231
          %s233 = smul.addr %s232, 8
          %s234 = scalar_lea.vmem %s1, %s233
          %s235 = smul.u32 2, %s19
        $region24: #{tpu_custom_call.1} parent=19 // pred_fallthru
          _
        // Predicated region
        $region25: #{tpu_custom_call.1} parent=19 // pred_check
          %p236 = pneg %p107
        $region26: #{tpu_custom_call.1} parent=19 // pred_check_branch
          %238 = sbr.rel (%p236) target = $region28
        $region27: #{tpu_custom_call.1} parent=19 // pred_region
          %p239 = scmp.lt.s32.totalorder %s20, 3
          %s240 = scalar_select %p239, %s20, 3
          %p241 = scmp.lt.s32.totalorder %s21, 0
          %s242 = scalar_select %p241, %s21, 0
          %s243 = smul.addr %s240, 4
          %s244 = sadd.s32 %s242, %s243
          %s245 = smul.addr %s244, 8
          %s246 = scalar_lea.vmem %s2, %s245
        $region28: #{tpu_custom_call.1} parent=19 // pred_fallthru
          _
        // Predicated region
        $region29: #{tpu_custom_call.1} parent=19 // pred_check
          %p247 = pneg %p135
        $region30: #{tpu_custom_call.1} parent=19 // pred_check_branch
          %249 = sbr.rel (%p247) target = $region32
        $region31: #{tpu_custom_call.1} parent=19 // pred_region
          %p250 = scmp.lt.s32.totalorder %s20, 3
          %s251 = scalar_select %p250, %s20, 3
          %p252 = scmp.lt.s32.totalorder %s21, 0
          %s253 = scalar_select %p252, %s21, 0
          %s254 = smul.addr %s251, 4
          %s255 = sadd.s32 %s253, %s254
          %s256 = smul.addr %s255, 8
          %s257 = scalar_lea.vmem %s3, %s256
        $region32: #{tpu_custom_call.1} parent=19 // pred_fallthru
          _
        // Predicated region
        $region33: #{tpu_custom_call.1} parent=19 // pred_check
          %p258 = pneg %p163
        $region34: #{tpu_custom_call.1} parent=19 // pred_check_branch
          %260 = sbr.rel (%p258) target = $region36
        $region35: #{tpu_custom_call.1} parent=19 // pred_region
          %s261 = smul.u32 8, %s21
          %p262 = scmp.lt.s32.totalorder %s20, 3
          %s263 = scalar_select %p262, %s20, 3
          %p264 = scmp.lt.s32.totalorder %s261, 7
          %s265 = scalar_select %p264, %s261, 7
          %s266 = smul.addr %s263, 8
          %s267 = sadd.s32 %s265, %s266
          %s268 = smul.addr %s267, 8
          %s269 = scalar_lea.vmem %s4, %s268
          %s270 = smul.u32 8, %s21
        $region36: #{tpu_custom_call.1} parent=19 // pred_fallthru
          _
      $region20: #{tpu_custom_call.1} parent=5 // pred_fallthru
        _
      %p271 = scmp.le.s32.totalorder 1, %s12
      %p272 = scmp.lt.s32.totalorder %s12, 5
      %p273 = pnand %p271, %p272
      %p274 = pneg %p273
      // Predicated region
      $region37: #{tpu_custom_call.1} parent=5 // pred_check
        _
      $region38: #{tpu_custom_call.1} parent=5 // pred_check_branch
        %276 = sbr.rel (%p273) target = $region40
      $region39: #{tpu_custom_call.1} parent=5 // pred_region
        %s277 = ssub.s32 %s12, 1
        %s278 = smul.u32 2, %s22
        %p279 = scmp.lt.s32.totalorder %s278, 1
        %s280 = scalar_select %p279, %s278, 1
        %s281 = smul.addr %s280, 8
        %s282 = scalar_lea.vmem %s0, %s281
        %p283 = pneg %p57
        %p284 = pneg %p54
        %s285 = smul.u32 2, %s22
        %p286 = scmp.lt.s32.totalorder %s23, 3
        %s287 = scalar_select %p286, %s23, 3
        %p288 = scmp.lt.s32.totalorder %s285, 1
        %s289 = scalar_select %p288, %s285, 1
        %s290 = smul.addr %s287, 2
        %s291 = sadd.s32 %s289, %s290
        %s292 = smul.addr %s291, 8
        %s293 = scalar_lea.vmem %s1, %s292
        %p294 = pneg %p85
        %p295 = pneg %p82
        %p296 = scmp.lt.s32.totalorder %s23, 3
        %s297 = scalar_select %p296, %s23, 3
        %p298 = scmp.lt.s32.totalorder %s24, 0
        %s299 = scalar_select %p298, %s24, 0
        %s300 = smul.addr %s297, 4
        %s301 = sadd.s32 %s299, %s300
        %s302 = smul.addr %s301, 8
        %s303 = scalar_lea.vmem %s2, %s302
        %p304 = pneg %p113
        %p305 = pneg %p110
        %p306 = scmp.lt.s32.totalorder %s23, 3
        %s307 = scalar_select %p306, %s23, 3
        %p308 = scmp.lt.s32.totalorder %s24, 0
        %s309 = scalar_select %p308, %s24, 0
        %s310 = smul.addr %s307, 4
        %s311 = sadd.s32 %s309, %s310
        %s312 = smul.addr %s311, 8
        %s313 = scalar_lea.vmem %s3, %s312
        %p314 = pneg %p141
        %p315 = pneg %p138
        %s316 = smul.u32 8, %s24
        %p317 = scmp.lt.s32.totalorder %s23, 3
        %s318 = scalar_select %p317, %s23, 3
        %p319 = scmp.lt.s32.totalorder %s316, 7
        %s320 = scalar_select %p319, %s316, 7
        %s321 = smul.addr %s318, 8
        %s322 = sadd.s32 %s320, %s321
        %s323 = smul.addr %s322, 8
        %s324 = scalar_lea.vmem %s4, %s323
        %p325 = pneg %p169
        %p326 = pneg %p166
        %p327 = pneg %p195
        %p328 = pneg %p192
        %s329 = smul.u32 2, %s22
        %p330 = scmp.lt.s32.totalorder %s329, 1
        %s331 = scalar_select %p330, %s329, 1
        %s332 = smul.addr %s331, 8
        %s333 = scalar_lea.vmem %s0, %s332
        %s334 = smul.u32 2, %s22
        %s335 = smul.u32 2, %s22
        %p336 = scmp.lt.s32.totalorder %s23, 3
        %s337 = scalar_select %p336, %s23, 3
        %p338 = scmp.lt.s32.totalorder %s335, 1
        %s339 = scalar_select %p338, %s335, 1
        %s340 = smul.addr %s337, 2
        %s341 = sadd.s32 %s339, %s340
        %s342 = smul.addr %s341, 8
        %s343 = scalar_lea.vmem %s1, %s342
        %s344 = smul.u32 2, %s22
        %p345 = scmp.lt.s32.totalorder %s23, 3
        %s346 = scalar_select %p345, %s23, 3
        %p347 = scmp.lt.s32.totalorder %s24, 0
        %s348 = scalar_select %p347, %s24, 0
        %s349 = smul.addr %s346, 4
        %s350 = sadd.s32 %s348, %s349
        %s351 = smul.addr %s350, 8
        %s352 = scalar_lea.vmem %s2, %s351
        %p353 = scmp.lt.s32.totalorder %s23, 3
        %s354 = scalar_select %p353, %s23, 3
        %p355 = scmp.lt.s32.totalorder %s24, 0
        %s356 = scalar_select %p355, %s24, 0
        %s357 = smul.addr %s354, 4
        %s358 = sadd.s32 %s356, %s357
        %s359 = smul.addr %s358, 8
        %s360 = scalar_lea.vmem %s3, %s359
        %s361 = smul.u32 8, %s24
        %p362 = scmp.lt.s32.totalorder %s23, 3
        %s363 = scalar_select %p362, %s23, 3
        %p364 = scmp.lt.s32.totalorder %s361, 7
        %s365 = scalar_select %p364, %s361, 7
        %s366 = smul.addr %s363, 8
        %s367 = sadd.s32 %s365, %s366
        %s368 = smul.addr %s367, 8
        %s369 = scalar_lea.vmem %s4, %s368
        %s370 = smul.u32 8, %s24
        %s371 = smul.u32 2, %s22
        %p372 = scmp.eq.s32.totalorder %s23, 0
        %p373 = scmp.eq.s32.totalorder %s24, 0
        %p374 = pnand %p372, %p373
        %p375 = pneg %p374
        // Predicated region
        $region41: #{tpu_custom_call.1} parent=39 // pred_check
          _
        $region42: #{tpu_custom_call.1} parent=39 // pred_check_branch
          %377 = sbr.rel (%p374) target = $region44
        $region43: #{tpu_custom_call.1} parent=39 // pred_region
          %vm378 = vcmask 261120
          %379 = vst.msk [vmem:[#allocation2] sm:$0xff] %vm378, 0.0
          %380 = vst.msk [vmem:[#allocation2 + $0x8] sm:$0xff] %vm378, 0.0
        $region44: #{tpu_custom_call.1} parent=39 // pred_fallthru
          _
        %v381 = vld [vmem:[%s333] sm:$0xff]
        %v382 = vld [vmem:[%s333 + $0x8] sm:$0xff]
        %v383 = vld [vmem:[%s352] sm:$0xff]
        %v384 = vld [vmem:[%s352 + $0x8] sm:$0xff]
        %v385 = vld [vmem:[%s352 + $0x10] sm:$0xff]
        %v386 = vld [vmem:[%s352 + $0x18] sm:$0xff]
        %vm387 = vcmask 261120
        %v389 = vsel %vm387, %v381, 0
        %v392 = vsel %vm387, %v382, 0
        %394 = vmatpush.msra.mxu0 0.0
        %395 = vmatpush.msra.mxu0 0.0
        %396 = vmatpush.msra.mxu0 0.0
        %397 = vmatpush.msra.mxu0 0.0
        %398 = vmatpush.msra.mxu0 0.0
        %399 = vmatpush.msra.mxu0 0.0
        %400 = vmatpush.msra.mxu0 0.0
        %401 = vmatpush.msra.mxu0 0.0
        %402 = vmatpush.msra.mxu0 0.0
        %403 = vmatpush.msra.mxu0 0.0
        %404 = vmatpush.msra.mxu0 0.0
        %405 = vmatpush.msra.mxu0 0.0
        %406 = vmatpush.msra.mxu0 %v386
        %407 = vmatpush.msra.mxu0 %v385
        %408 = vmatpush.msra.mxu0 %v384
        %409 = vmatpush.msra.mxu0 %v383
        %410 = vmatmul.f32.gmra.mxu0 %v389
        %v411 = vpop.f32.mrf.mxu0
        %v412 = vadd.f32 0.0, %v411
        %413 = vmatmul.f32.gmra.mxu0 %v392
        %v414 = vpop.f32.mrf.mxu0
        %v415 = vadd.f32 0.0, %v414
        %416 = vdwg.mxu0
        %v417 = vld [vmem:[%s360] sm:$0xff]
        %v418 = vld [vmem:[%s360 + $0x8] sm:$0xff]
        %v419 = vld [vmem:[%s360 + $0x10] sm:$0xff]
        %v420 = vld [vmem:[%s360 + $0x18] sm:$0xff]
        %421 = vmatpush.msra.mxu0 0.0
        %422 = vmatpush.msra.mxu0 0.0
        %423 = vmatpush.msra.mxu0 0.0
        %424 = vmatpush.msra.mxu0 0.0
        %425 = vmatpush.msra.mxu0 0.0
        %426 = vmatpush.msra.mxu0 0.0
        %427 = vmatpush.msra.mxu0 0.0
        %428 = vmatpush.msra.mxu0 0.0
        %429 = vmatpush.msra.mxu0 0.0
        %430 = vmatpush.msra.mxu0 0.0
        %431 = vmatpush.msra.mxu0 0.0
        %432 = vmatpush.msra.mxu0 0.0
        %433 = vmatpush.msra.mxu0 %v420
        %434 = vmatpush.msra.mxu0 %v419
        %435 = vmatpush.msra.mxu0 %v418
        %436 = vmatpush.msra.mxu0 %v417
        %437 = vmatmul.f32.gmra.mxu0 %v389
        %v438 = vpop.f32.mrf.mxu0
        %v439 = vadd.f32 0.0, %v438
        %440 = vmatmul.f32.gmra.mxu0 %v392
        %v441 = vpop.f32.mrf.mxu0
        %v442 = vadd.f32 0.0, %v441
        %443 = vdwg.mxu0
        %v444 = vxor.u32 %v412, 2147483648
        %v445 = vxor.u32 %v415, 2147483648
        %v446 = vmul.f32 %v444, 1.442695
        %v447 = vpow.pop %v446
        %v448 = vmul.f32 %v445, 1.442695
        %v449 = vpow.pop %v448
        %v450 = vadd.f32 %v447, 1.0
        %v451 = vadd.f32 %v449, 1.0
        %v452 = vrcp.pop %v450
        %v453 = vmul.f32 %v450, %v452
        %v454 = vsub.f32 1.0, %v453
        %v455 = vmul.f32 %v452, %v454
        %v456 = vadd.f32 %v452, %v455
        %vm457 = vweird.f32 %v450
        %vm458 = vweird.f32 %v452
        %vm459 = vmor %vm457, %vm458
        %v460 = vsel %vm459, %v452, %v456
        %v461 = vand.u32 2147483647, %v450
        %vm462 = vcmp.eq.f32.partialorder %v461, 8.507059e+37
        %v463 = vand.u32 %v450, 2147483648
        %v464 = vor.u32 1.1754944e-38, %v463
        %v465 = vsel %vm462, %v464, %v460
        %v466 = vmul.f32 1.0, %v465
        %v467 = vrcp.pop %v451
        %v468 = vmul.f32 %v451, %v467
        %v469 = vsub.f32 1.0, %v468
        %v470 = vmul.f32 %v467, %v469
        %v471 = vadd.f32 %v467, %v470
        %vm472 = vweird.f32 %v451
        %vm473 = vweird.f32 %v467
        %vm474 = vmor %vm472, %vm473
        %v475 = vsel %vm474, %v467, %v471
        %v476 = vand.u32 2147483647, %v451
        %vm477 = vcmp.eq.f32.partialorder %v476, 8.507059e+37
        %v478 = vand.u32 %v451, 2147483648
        %v479 = vor.u32 1.1754944e-38, %v478
        %v480 = vsel %vm477, %v479, %v475
        %v481 = vmul.f32 1.0, %v480
        %v482 = vmul.f32 %v412, %v466
        %v483 = vmul.f32 %v415, %v481
        %v484 = vmul.f32 %v482, %v439
        %v485 = vmul.f32 %v483, %v442
        %v486 = vld [vmem:[%s369] sm:$0xff]
        %v487 = vld [vmem:[%s369 + $0x8] sm:$0xff]
        %v488 = vld [vmem:[%s369 + $0x10] sm:$0xff]
        %v489 = vld [vmem:[%s369 + $0x18] sm:$0xff]
        %v490 = vld [vmem:[%s369 + $0x20] sm:$0xff]
        %v491 = vld [vmem:[%s369 + $0x28] sm:$0xff]
        %v492 = vld [vmem:[%s369 + $0x30] sm:$0xff]
        %v493 = vld [vmem:[%s369 + $0x38] sm:$0xff]
        %vm494 = vcmask 523264
        %v496 = vsel %vm494, %v484, 0
        %v499 = vsel %vm494, %v485, 0
        %501 = vmatpush.msra.mxu0 0.0
        %502 = vmatpush.msra.mxu0 0.0
        %503 = vmatpush.msra.mxu0 0.0
        %504 = vmatpush.msra.mxu0 0.0
        %505 = vmatpush.msra.mxu0 0.0
        %506 = vmatpush.msra.mxu0 0.0
        %507 = vmatpush.msra.mxu0 0.0
        %508 = vmatpush.msra.mxu0 0.0
        %509 = vmatpush.msra.mxu0 %v493
        %510 = vmatpush.msra.mxu0 %v492
        %511 = vmatpush.msra.mxu0 %v491
        %512 = vmatpush.msra.mxu0 %v490
        %513 = vmatpush.msra.mxu0 %v489
        %514 = vmatpush.msra.mxu0 %v488
        %515 = vmatpush.msra.mxu0 %v487
        %516 = vmatpush.msra.mxu0 %v486
        %517 = vmatmul.f32.gmra.mxu0 %v496
        %v518 = vpop.f32.mrf.mxu0
        %v519 = vadd.f32 0.0, %v518
        %520 = vmatmul.f32.gmra.mxu0 %v499
        %v521 = vpop.f32.mrf.mxu0
        %v522 = vadd.f32 0.0, %v521
        %523 = vdwg.mxu0
        %v524 = vld [vmem:[%s343] sm:$0xff]
        %v525 = vld [vmem:[%s343 + $0x8] sm:$0xff]
        %v526 = vld [vmem:[#allocation2] sm:$0xff]
        %v527 = vld [vmem:[#allocation2 + $0x8] sm:$0xff]
        %529 = vset.pattern.permute.xlu0 0
        %530 = vperm.xlu0 %529, %v524
        %v531 = vpop.permute.xlu0 %530
        %534 = vset.pattern.permute.xlu0 0
        %535 = vperm.xlu0 %534, %v525
        %v536 = vpop.permute.xlu0 %535
        %v538 = vmul.f32 %v531, %v519
        %v539 = vmul.f32 %v536, %v522
        %v540 = vadd.f32 %v526, %v538
        %v541 = vadd.f32 %v527, %v539
        %542 = vst.msk [vmem:[#allocation2] sm:$0xff] %vm387, %v540
        %543 = vst.msk [vmem:[#allocation2 + $0x8] sm:$0xff] %vm387, %v541
        %p544 = scmp.eq.s32.totalorder %s23, 3
        %p545 = pnand %p544, %p373
        %p546 = pneg %p545
        // Predicated region
        $region45: #{tpu_custom_call.1} parent=39 // pred_check
          _
        $region46: #{tpu_custom_call.1} parent=39 // pred_check_branch
          %548 = sbr.rel (%p545) target = $region48
        $region47: #{tpu_custom_call.1} parent=39 // pred_region
          %v549 = vld [vmem:[#allocation2] sm:$0xff]
          %v550 = vld [vmem:[#allocation2 + $0x8] sm:$0xff]
          %551 = vst.msk [vmem:[#allocation3] sm:$0xff] %vm387, %v549
          %552 = vst.msk [vmem:[#allocation3 + $0x8] sm:$0xff] %vm387, %v550
        $region48: #{tpu_custom_call.1} parent=39 // pred_fallthru
          _
        // Predicated region
        $region49: #{tpu_custom_call.1} parent=39 // pred_check
          %p553 = pneg %p192
        $region50: #{tpu_custom_call.1} parent=39 // pred_check_branch
          %555 = sbr.rel (%p553) target = $region52
        $region51: #{tpu_custom_call.1} parent=39 // pred_region
          %s556 = smul.u32 2, %s22
          %558 = vsyncadd [#allocation4], 0
          %s559 = smul.addr %s556, 8
          %s560 = scalar_lea.hbm %s5, %s559
          %s561 = sshll.u32 [#allocation3], 4
          %s562 = int_to_ptr.vmem [resolvable:$true] %s561
          %s563 = sshll.u32 %s560, 4
          %s564 = int_to_ptr.hbm [resolvable:$true] %s563
          %569 = dma.vmem_to_hbm [thread:$0]  %s562, 256, %s564, [#allocation4], 128, 128, 8
        $region52: #{tpu_custom_call.1} parent=39 // pred_fallthru
          _
        // Predicated region
        $region53: #{tpu_custom_call.1} parent=39 // pred_check
          %p570 = pneg %p192
        $region54: #{tpu_custom_call.1} parent=39 // pred_check_branch
          %572 = sbr.rel (%p570) target = $region56
        $region55: #{tpu_custom_call.1} parent=39 // pred_region
          %574 = dma.done [#allocation4], 256
        $region56: #{tpu_custom_call.1} parent=39 // pred_fallthru
          _
      $region40: #{tpu_custom_call.1} parent=5 // pred_fallthru
        _
      %p575 = scmp.le.s32.totalorder 2, %s12
      // Predicated region
      $region57: #{tpu_custom_call.1} parent=5 // pred_check
        %p576 = pneg %p575
      $region58: #{tpu_custom_call.1} parent=5 // pred_check_branch
        %578 = sbr.rel (%p576) target = $region60
      $region59: #{tpu_custom_call.1} parent=5 // pred_region
        %s579 = ssub.s32 %s12, 2
      $region60: #{tpu_custom_call.1} parent=5 // pred_fallthru
        _
    $region6: #{tpu_custom_call.1} parent=1 // loop_footer
      %s16 = sadd.s32 1, %s12
    $region7: #{tpu_custom_call.1} parent=1 // loop_footer_branch
      %11 = sbr.rel target = $region3
    $region8: #{tpu_custom_call.1} parent=1 // loop_exit
      _
    %580 = vsyncpa [#allocation4], 1
    %s581 = scalar_lea.sflag [#allocation4], 1
    %582 = vsyncpa %s581, 1

</llo_original>
